<compile_context>
chip_gen: v7x
topology: tpu7x:2x2x1
jax: 0.10.0
libtpu: 0.0.40
codegen_flags: <defaults>
</compile_context>

<pallas_src>
import jax
import jax.numpy as jnp
from jax.experimental import pallas as pl
from jax.experimental.pallas import tpu as pltpu

# logical dims of the PyTorch module
D_IN, H1, H2, D_OUT = 2, 18, 4, 1

LANES = 128            # lane granularity of the batch tiling
MAX_TB = 4096          # batch columns per grid step


def _round_up(n, m):
    return (n + m - 1) // m * m


def _mlp_kernel(x_ref, w1_ref, b1_ref, w2_ref, b2_ref, w3_ref, b3_ref, out_ref):
    """Fused fc1 -> relu -> fc2 -> relu -> fc3 -> sigmoid on one batch tile.

    Layout: batch on lanes, features on sublanes.  Intermediates are
    (18, TB) / (4, TB) / (1, TB); epilogue (exp, divide, store) runs on the
    single live output row, i.e. lane-dense.
    """
    x = x_ref[...]            # (2, TB)   batch on lanes
    w1 = w1_ref[...]          # (18, 2)
    w2 = w2_ref[...]          # (4, 18)
    w3 = w3_ref[...]          # (1, 4)

    # fc1 (K = 2): stride-0 sublane broadcast of the two input rows,
    # lane broadcast of the two weight columns.
    z1 = (w1[:, 0:1] * x[0:1, :]
          + w1[:, 1:2] * x[1:2, :]
          + b1_ref[...])                       # (18, TB)
    a1 = jnp.maximum(z1, 0.0)

    # fc2 (K = 18): exact f32, unrolled on the VPU (contraction far too small
    # for the MXU to matter after the transpose).
    acc2 = b2_ref[...]                         # (4, 1) -> broadcasts to (4, TB)
    for k in range(H1):
        acc2 = acc2 + w2[:, k:k + 1] * a1[k:k + 1, :]
    a2 = jnp.maximum(acc2, 0.0)                # (4, TB)

    # fc3 (K = 4): single live output row.
    acc3 = b3_ref[...]                         # (1, 1)
    for k in range(H2):
        acc3 = acc3 + w3[:, k:k + 1] * a2[k:k + 1, :]
    z3 = acc3                                  # (1, TB)

    # Numerically stable sigmoid on the lane-dense row, then unmasked store.
    ez = jnp.exp(-jnp.abs(z3))
    out_ref[...] = jnp.where(z3 >= 0.0, 1.0 / (1.0 + ez), ez / (1.0 + ez))


def prepare_params(params):
    """Cast to f32 and reshape biases to columns, once, outside the call path."""
    w1, b1 = params["fc1"]   # (18, 2), (18,)
    w2, b2 = params["fc2"]   # (4, 18), (4,)
    w3, b3 = params["fc3"]   # (1, 4),  (1,)
    f32 = jnp.float32
    return {
        "w1": w1.astype(f32), "b1": b1.astype(f32)[:, None],
        "w2": w2.astype(f32), "b2": b2.astype(f32)[:, None],
        "w3": w3.astype(f32), "b3": b3.astype(f32)[:, None],
    }


@jax.jit
def neural_network_forward(x, prep):
    """x: (B, 2) float.  Returns the module forward pass, shape (B, 1) float32."""
    B = x.shape[0]
    x = x.astype(jnp.float32)

    # Batch lives on the lane axis -> pad to a multiple of 128 lanes.
    PB0 = _round_up(max(B, LANES), LANES)
    # Prefer >= 2 tiles when the batch allows (v7x has 2 TensorCores and the
    # grid axis is "parallel"); cap the tile at MAX_TB.  VMEM use per tile is
    # tiny (<< 32 MiB scoped limit on all of v5e/v6e/v7x).
    want_tiles = 2 if PB0 >= 2 * LANES else 1
    TB = min(MAX_TB, _round_up(-(-PB0 // want_tiles), LANES))
    PB = _round_up(PB0, TB)
    num_tiles = PB // TB

    # Lane-dense input slab (2, PB): same HBM bytes as (B, 2), far fewer vregs.
    if PB == B:
        xt = x.T
    else:
        xt = jnp.zeros((D_IN, PB), jnp.float32).at[:, :B].set(x.T)

    def const(a):
        return pl.BlockSpec(a.shape, lambda i: (0, 0))

    out = pl.pallas_call(
        _mlp_kernel,
        out_shape=jax.ShapeDtypeStruct((1, PB), jnp.float32),
        grid=(num_tiles,),
        in_specs=[
            pl.BlockSpec((D_IN, TB), lambda i: (0, i)),    # batch-tiled input
            const(prep["w1"]), const(prep["b1"]),           # resident weights
            const(prep["w2"]), const(prep["b2"]),
            const(prep["w3"]), const(prep["b3"]),
        ],
        out_specs=pl.BlockSpec((1, TB), lambda i: (0, i)),  # lane-dense output
        compiler_params=pltpu.CompilerParams(
            dimension_semantics=("parallel",),
            vmem_limit_bytes=32 * 1024 * 1024,
        ),
    )(xt, prep["w1"], prep["b1"], prep["w2"], prep["b2"], prep["w3"], prep["b3"])

    return out[0, :B][:, None]


def init_params(key):
    """Deterministic init mirroring PyTorch nn.Linear (uniform +/- 1/sqrt(fan_in))."""
    def linear(key, fan_in, fan_out):
        kw, kb = jax.random.split(key)
        bound = 1.0 / jnp.sqrt(fan_in)
        w = jax.random.uniform(kw, (fan_out, fan_in), jnp.float32, -bound, bound)
        b = jax.random.uniform(kb, (fan_out,), jnp.float32, -bound, bound)
        return w, b

    k1, k2, k3 = jax.random.split(key, 3)
    return {
        "fc1": linear(k1, D_IN, H1),
        "fc2": linear(k2, H1, H2),
        "fc3": linear(k3, H2, D_OUT),
    }


def _reference_forward(x, params):
    hp = jax.lax.Precision.HIGHEST   # exact f32 reference (no bf16 MXU passes)
    w1, b1 = params["fc1"]
    w2, b2 = params["fc2"]
    w3, b3 = params["fc3"]
    a1 = jnp.maximum(jnp.dot(x, w1.T, precision=hp) + b1, 0.0)
    a2 = jnp.maximum(jnp.dot(a1, w2.T, precision=hp) + b2, 0.0)
    return jax.nn.sigmoid(jnp.dot(a2, w3.T, precision=hp) + b3)


if __name__ == "__main__":
    key = jax.random.PRNGKey(0)
    kp, kx = jax.random.split(key)
    params = init_params(kp)
    prep = prepare_params(params)

    # small batch (single tile)
    x = jax.random.normal(kx, (4, D_IN), jnp.float32)
    out = jax.block_until_ready(neural_network_forward(x, prep))
    ref = _reference_forward(x, params)
    assert out.shape == (4, 1), out.shape
    assert jnp.allclose(out, ref, atol=1e-5, rtol=1e-5), (out, ref)

    # larger ragged batch (exercises the 2-tile "parallel" grid + padded lanes)
    xb = jax.random.normal(jax.random.PRNGKey(1), (1037, D_IN), jnp.float32)
    outb = jax.block_until_ready(neural_network_forward(xb, prep))
    refb = _reference_forward(xb, params)
    assert outb.shape == (1037, 1), outb.shape
    assert jnp.allclose(outb, refb, atol=1e-5, rtol=1e-5)

    print("KERNEL_OK")
</pallas_src>

<mosaic_0001>
module attributes {stable_mosaic.version = 11 : i64} {
  func.func @_mlp_kernel(%arg0: i32, %arg1: memref<2x128xf32, #tpu.memory_space<vmem>>, %arg2: memref<18x2xf32, #tpu.memory_space<vmem>>, %arg3: memref<18x1xf32, #tpu.memory_space<vmem>>, %arg4: memref<4x18xf32, #tpu.memory_space<vmem>>, %arg5: memref<4x1xf32, #tpu.memory_space<vmem>>, %arg6: memref<1x4xf32, #tpu.memory_space<vmem>>, %arg7: memref<1x1xf32, #tpu.memory_space<vmem>>, %arg8: memref<1x128xf32, #tpu.memory_space<vmem>>) attributes {dimension_semantics = [#tpu.dimension_semantics<parallel>], iteration_bounds = array<i64: 1>, scalar_prefetch = 0 : i64, scratch_operands = 0 : i64, tpu.core_type = #tpu.core_type<tc>, window_params = [{transform_indices = @transform_0, window_bounds = array<i64: 2, 128>}, {pipeline_mode = #tpu.pipeline_mode<synchronous>, transform_indices = @transform_1, window_bounds = array<i64: 18, 2>}, {pipeline_mode = #tpu.pipeline_mode<synchronous>, transform_indices = @transform_2, window_bounds = array<i64: 18, 1>}, {pipeline_mode = #tpu.pipeline_mode<synchronous>, transform_indices = @transform_3, window_bounds = array<i64: 4, 18>}, {pipeline_mode = #tpu.pipeline_mode<synchronous>, transform_indices = @transform_4, window_bounds = array<i64: 4, 1>}, {pipeline_mode = #tpu.pipeline_mode<synchronous>, transform_indices = @transform_5, window_bounds = array<i64: 1, 4>}, {pipeline_mode = #tpu.pipeline_mode<synchronous>, transform_indices = @transform_6, window_bounds = array<i64: 1, 1>}, {transform_indices = @transform_7, window_bounds = array<i64: 1, 128>}]} {
    %c0 = arith.constant 0 : index
    %c0_0 = arith.constant 0 : index
    %0 = vector.load %arg1[%c0, %c0_0] : memref<2x128xf32, #tpu.memory_space<vmem>>, vector<2x128xf32>
    %c0_1 = arith.constant 0 : index
    %c0_2 = arith.constant 0 : index
    %1 = vector.load %arg2[%c0_1, %c0_2] : memref<18x2xf32, #tpu.memory_space<vmem>>, vector<18x2xf32>
    %c0_3 = arith.constant 0 : index
    %c0_4 = arith.constant 0 : index
    %2 = vector.load %arg4[%c0_3, %c0_4] : memref<4x18xf32, #tpu.memory_space<vmem>>, vector<4x18xf32>
    %c0_5 = arith.constant 0 : index
    %c0_6 = arith.constant 0 : index
    %3 = vector.load %arg6[%c0_5, %c0_6] : memref<1x4xf32, #tpu.memory_space<vmem>>, vector<1x4xf32>
    %4 = vector.extract_strided_slice %1 {offsets = [0, 0], sizes = [18, 1], strides = [1, 1]} : vector<18x2xf32> to vector<18x1xf32>
    %5 = vector.extract_strided_slice %0 {offsets = [0, 0], sizes = [1, 128], strides = [1, 1]} : vector<2x128xf32> to vector<1x128xf32>
    %6 = vector.broadcast %4 : vector<18x1xf32> to vector<18x128xf32>
    %7 = vector.broadcast %5 : vector<1x128xf32> to vector<18x128xf32>
    %8 = arith.mulf %6, %7 : vector<18x128xf32>
    %9 = vector.extract_strided_slice %1 {offsets = [0, 1], sizes = [18, 1], strides = [1, 1]} : vector<18x2xf32> to vector<18x1xf32>
    %10 = vector.extract_strided_slice %0 {offsets = [1, 0], sizes = [1, 128], strides = [1, 1]} : vector<2x128xf32> to vector<1x128xf32>
    %11 = vector.broadcast %9 : vector<18x1xf32> to vector<18x128xf32>
    %12 = vector.broadcast %10 : vector<1x128xf32> to vector<18x128xf32>
    %13 = arith.mulf %11, %12 : vector<18x128xf32>
    %14 = arith.addf %8, %13 : vector<18x128xf32>
    %c0_7 = arith.constant 0 : index
    %c0_8 = arith.constant 0 : index
    %15 = vector.load %arg3[%c0_7, %c0_8] : memref<18x1xf32, #tpu.memory_space<vmem>>, vector<18x1xf32>
    %16 = vector.broadcast %15 : vector<18x1xf32> to vector<18x128xf32>
    %17 = arith.addf %14, %16 : vector<18x128xf32>
    %cst = arith.constant 0.000000e+00 : f32
    %18 = vector.broadcast %cst : f32 to vector<18x128xf32>
    %19 = arith.maximumf %17, %18 : vector<18x128xf32>
    %c0_9 = arith.constant 0 : index
    %c0_10 = arith.constant 0 : index
    %20 = vector.load %arg5[%c0_9, %c0_10] : memref<4x1xf32, #tpu.memory_space<vmem>>, vector<4x1xf32>
    %21 = vector.extract_strided_slice %2 {offsets = [0, 0], sizes = [4, 1], strides = [1, 1]} : vector<4x18xf32> to vector<4x1xf32>
    %22 = vector.extract_strided_slice %19 {offsets = [0, 0], sizes = [1, 128], strides = [1, 1]} : vector<18x128xf32> to vector<1x128xf32>
    %23 = vector.broadcast %21 : vector<4x1xf32> to vector<4x128xf32>
    %24 = vector.broadcast %22 : vector<1x128xf32> to vector<4x128xf32>
    %25 = arith.mulf %23, %24 : vector<4x128xf32>
    %26 = vector.broadcast %20 : vector<4x1xf32> to vector<4x128xf32>
    %27 = arith.addf %26, %25 : vector<4x128xf32>
    %28 = vector.extract_strided_slice %2 {offsets = [0, 1], sizes = [4, 1], strides = [1, 1]} : vector<4x18xf32> to vector<4x1xf32>
    %29 = vector.extract_strided_slice %19 {offsets = [1, 0], sizes = [1, 128], strides = [1, 1]} : vector<18x128xf32> to vector<1x128xf32>
    %30 = vector.broadcast %28 : vector<4x1xf32> to vector<4x128xf32>
    %31 = vector.broadcast %29 : vector<1x128xf32> to vector<4x128xf32>
    %32 = arith.mulf %30, %31 : vector<4x128xf32>
    %33 = arith.addf %27, %32 : vector<4x128xf32>
    %34 = vector.extract_strided_slice %2 {offsets = [0, 2], sizes = [4, 1], strides = [1, 1]} : vector<4x18xf32> to vector<4x1xf32>
    %35 = vector.extract_strided_slice %19 {offsets = [2, 0], sizes = [1, 128], strides = [1, 1]} : vector<18x128xf32> to vector<1x128xf32>
    %36 = vector.broadcast %34 : vector<4x1xf32> to vector<4x128xf32>
    %37 = vector.broadcast %35 : vector<1x128xf32> to vector<4x128xf32>
    %38 = arith.mulf %36, %37 : vector<4x128xf32>
    %39 = arith.addf %33, %38 : vector<4x128xf32>
    %40 = vector.extract_strided_slice %2 {offsets = [0, 3], sizes = [4, 1], strides = [1, 1]} : vector<4x18xf32> to vector<4x1xf32>
    %41 = vector.extract_strided_slice %19 {offsets = [3, 0], sizes = [1, 128], strides = [1, 1]} : vector<18x128xf32> to vector<1x128xf32>
    %42 = vector.broadcast %40 : vector<4x1xf32> to vector<4x128xf32>
    %43 = vector.broadcast %41 : vector<1x128xf32> to vector<4x128xf32>
    %44 = arith.mulf %42, %43 : vector<4x128xf32>
    %45 = arith.addf %39, %44 : vector<4x128xf32>
    %46 = vector.extract_strided_slice %2 {offsets = [0, 4], sizes = [4, 1], strides = [1, 1]} : vector<4x18xf32> to vector<4x1xf32>
    %47 = vector.extract_strided_slice %19 {offsets = [4, 0], sizes = [1, 128], strides = [1, 1]} : vector<18x128xf32> to vector<1x128xf32>
    %48 = vector.broadcast %46 : vector<4x1xf32> to vector<4x128xf32>
    %49 = vector.broadcast %47 : vector<1x128xf32> to vector<4x128xf32>
    %50 = arith.mulf %48, %49 : vector<4x128xf32>
    %51 = arith.addf %45, %50 : vector<4x128xf32>
    %52 = vector.extract_strided_slice %2 {offsets = [0, 5], sizes = [4, 1], strides = [1, 1]} : vector<4x18xf32> to vector<4x1xf32>
    %53 = vector.extract_strided_slice %19 {offsets = [5, 0], sizes = [1, 128], strides = [1, 1]} : vector<18x128xf32> to vector<1x128xf32>
    %54 = vector.broadcast %52 : vector<4x1xf32> to vector<4x128xf32>
    %55 = vector.broadcast %53 : vector<1x128xf32> to vector<4x128xf32>
    %56 = arith.mulf %54, %55 : vector<4x128xf32>
    %57 = arith.addf %51, %56 : vector<4x128xf32>
    %58 = vector.extract_strided_slice %2 {offsets = [0, 6], sizes = [4, 1], strides = [1, 1]} : vector<4x18xf32> to vector<4x1xf32>
    %59 = vector.extract_strided_slice %19 {offsets = [6, 0], sizes = [1, 128], strides = [1, 1]} : vector<18x128xf32> to vector<1x128xf32>
    %60 = vector.broadcast %58 : vector<4x1xf32> to vector<4x128xf32>
    %61 = vector.broadcast %59 : vector<1x128xf32> to vector<4x128xf32>
    %62 = arith.mulf %60, %61 : vector<4x128xf32>
    %63 = arith.addf %57, %62 : vector<4x128xf32>
    %64 = vector.extract_strided_slice %2 {offsets = [0, 7], sizes = [4, 1], strides = [1, 1]} : vector<4x18xf32> to vector<4x1xf32>
    %65 = vector.extract_strided_slice %19 {offsets = [7, 0], sizes = [1, 128], strides = [1, 1]} : vector<18x128xf32> to vector<1x128xf32>
    %66 = vector.broadcast %64 : vector<4x1xf32> to vector<4x128xf32>
    %67 = vector.broadcast %65 : vector<1x128xf32> to vector<4x128xf32>
    %68 = arith.mulf %66, %67 : vector<4x128xf32>
    %69 = arith.addf %63, %68 : vector<4x128xf32>
    %70 = vector.extract_strided_slice %2 {offsets = [0, 8], sizes = [4, 1], strides = [1, 1]} : vector<4x18xf32> to vector<4x1xf32>
    %71 = vector.extract_strided_slice %19 {offsets = [8, 0], sizes = [1, 128], strides = [1, 1]} : vector<18x128xf32> to vector<1x128xf32>
    %72 = vector.broadcast %70 : vector<4x1xf32> to vector<4x128xf32>
    %73 = vector.broadcast %71 : vector<1x128xf32> to vector<4x128xf32>
    %74 = arith.mulf %72, %73 : vector<4x128xf32>
    %75 = arith.addf %69, %74 : vector<4x128xf32>
    %76 = vector.extract_strided_slice %2 {offsets = [0, 9], sizes = [4, 1], strides = [1, 1]} : vector<4x18xf32> to vector<4x1xf32>
    %77 = vector.extract_strided_slice %19 {offsets = [9, 0], sizes = [1, 128], strides = [1, 1]} : vector<18x128xf32> to vector<1x128xf32>
    %78 = vector.broadcast %76 : vector<4x1xf32> to vector<4x128xf32>
    %79 = vector.broadcast %77 : vector<1x128xf32> to vector<4x128xf32>
    %80 = arith.mulf %78, %79 : vector<4x128xf32>
    %81 = arith.addf %75, %80 : vector<4x128xf32>
    %82 = vector.extract_strided_slice %2 {offsets = [0, 10], sizes = [4, 1], strides = [1, 1]} : vector<4x18xf32> to vector<4x1xf32>
    %83 = vector.extract_strided_slice %19 {offsets = [10, 0], sizes = [1, 128], strides = [1, 1]} : vector<18x128xf32> to vector<1x128xf32>
    %84 = vector.broadcast %82 : vector<4x1xf32> to vector<4x128xf32>
    %85 = vector.broadcast %83 : vector<1x128xf32> to vector<4x128xf32>
    %86 = arith.mulf %84, %85 : vector<4x128xf32>
    %87 = arith.addf %81, %86 : vector<4x128xf32>
    %88 = vector.extract_strided_slice %2 {offsets = [0, 11], sizes = [4, 1], strides = [1, 1]} : vector<4x18xf32> to vector<4x1xf32>
    %89 = vector.extract_strided_slice %19 {offsets = [11, 0], sizes = [1, 128], strides = [1, 1]} : vector<18x128xf32> to vector<1x128xf32>
    %90 = vector.broadcast %88 : vector<4x1xf32> to vector<4x128xf32>
    %91 = vector.broadcast %89 : vector<1x128xf32> to vector<4x128xf32>
    %92 = arith.mulf %90, %91 : vector<4x128xf32>
    %93 = arith.addf %87, %92 : vector<4x128xf32>
    %94 = vector.extract_strided_slice %2 {offsets = [0, 12], sizes = [4, 1], strides = [1, 1]} : vector<4x18xf32> to vector<4x1xf32>
    %95 = vector.extract_strided_slice %19 {offsets = [12, 0], sizes = [1, 128], strides = [1, 1]} : vector<18x128xf32> to vector<1x128xf32>
    %96 = vector.broadcast %94 : vector<4x1xf32> to vector<4x128xf32>
    %97 = vector.broadcast %95 : vector<1x128xf32> to vector<4x128xf32>
    %98 = arith.mulf %96, %97 : vector<4x128xf32>
    %99 = arith.addf %93, %98 : vector<4x128xf32>
    %100 = vector.extract_strided_slice %2 {offsets = [0, 13], sizes = [4, 1], strides = [1, 1]} : vector<4x18xf32> to vector<4x1xf32>
    %101 = vector.extract_strided_slice %19 {offsets = [13, 0], sizes = [1, 128], strides = [1, 1]} : vector<18x128xf32> to vector<1x128xf32>
    %102 = vector.broadcast %100 : vector<4x1xf32> to vector<4x128xf32>
    %103 = vector.broadcast %101 : vector<1x128xf32> to vector<4x128xf32>
    %104 = arith.mulf %102, %103 : vector<4x128xf32>
    %105 = arith.addf %99, %104 : vector<4x128xf32>
    %106 = vector.extract_strided_slice %2 {offsets = [0, 14], sizes = [4, 1], strides = [1, 1]} : vector<4x18xf32> to vector<4x1xf32>
    %107 = vector.extract_strided_slice %19 {offsets = [14, 0], sizes = [1, 128], strides = [1, 1]} : vector<18x128xf32> to vector<1x128xf32>
    %108 = vector.broadcast %106 : vector<4x1xf32> to vector<4x128xf32>
    %109 = vector.broadcast %107 : vector<1x128xf32> to vector<4x128xf32>
    %110 = arith.mulf %108, %109 : vector<4x128xf32>
    %111 = arith.addf %105, %110 : vector<4x128xf32>
    %112 = vector.extract_strided_slice %2 {offsets = [0, 15], sizes = [4, 1], strides = [1, 1]} : vector<4x18xf32> to vector<4x1xf32>
    %113 = vector.extract_strided_slice %19 {offsets = [15, 0], sizes = [1, 128], strides = [1, 1]} : vector<18x128xf32> to vector<1x128xf32>
    %114 = vector.broadcast %112 : vector<4x1xf32> to vector<4x128xf32>
    %115 = vector.broadcast %113 : vector<1x128xf32> to vector<4x128xf32>
    %116 = arith.mulf %114, %115 : vector<4x128xf32>
    %117 = arith.addf %111, %116 : vector<4x128xf32>
    %118 = vector.extract_strided_slice %2 {offsets = [0, 16], sizes = [4, 1], strides = [1, 1]} : vector<4x18xf32> to vector<4x1xf32>
    %119 = vector.extract_strided_slice %19 {offsets = [16, 0], sizes = [1, 128], strides = [1, 1]} : vector<18x128xf32> to vector<1x128xf32>
    %120 = vector.broadcast %118 : vector<4x1xf32> to vector<4x128xf32>
    %121 = vector.broadcast %119 : vector<1x128xf32> to vector<4x128xf32>
    %122 = arith.mulf %120, %121 : vector<4x128xf32>
    %123 = arith.addf %117, %122 : vector<4x128xf32>
    %124 = vector.extract_strided_slice %2 {offsets = [0, 17], sizes = [4, 1], strides = [1, 1]} : vector<4x18xf32> to vector<4x1xf32>
    %125 = vector.extract_strided_slice %19 {offsets = [17, 0], sizes = [1, 128], strides = [1, 1]} : vector<18x128xf32> to vector<1x128xf32>
    %126 = vector.broadcast %124 : vector<4x1xf32> to vector<4x128xf32>
    %127 = vector.broadcast %125 : vector<1x128xf32> to vector<4x128xf32>
    %128 = arith.mulf %126, %127 : vector<4x128xf32>
    %129 = arith.addf %123, %128 : vector<4x128xf32>
    %cst_11 = arith.constant 0.000000e+00 : f32
    %130 = vector.broadcast %cst_11 : f32 to vector<4x128xf32>
    %131 = arith.maximumf %129, %130 : vector<4x128xf32>
    %c0_12 = arith.constant 0 : index
    %c0_13 = arith.constant 0 : index
    %132 = vector.load %arg7[%c0_12, %c0_13] : memref<1x1xf32, #tpu.memory_space<vmem>>, vector<1x1xf32>
    %133 = vector.extract_strided_slice %3 {offsets = [0, 0], sizes = [1, 1], strides = [1, 1]} : vector<1x4xf32> to vector<1x1xf32>
    %134 = vector.extract_strided_slice %131 {offsets = [0, 0], sizes = [1, 128], strides = [1, 1]} : vector<4x128xf32> to vector<1x128xf32>
    %135 = vector.broadcast %133 : vector<1x1xf32> to vector<1x128xf32>
    %136 = arith.mulf %135, %134 : vector<1x128xf32>
    %137 = vector.broadcast %132 : vector<1x1xf32> to vector<1x128xf32>
    %138 = arith.addf %137, %136 : vector<1x128xf32>
    %139 = vector.extract_strided_slice %3 {offsets = [0, 1], sizes = [1, 1], strides = [1, 1]} : vector<1x4xf32> to vector<1x1xf32>
    %140 = vector.extract_strided_slice %131 {offsets = [1, 0], sizes = [1, 128], strides = [1, 1]} : vector<4x128xf32> to vector<1x128xf32>
    %141 = vector.broadcast %139 : vector<1x1xf32> to vector<1x128xf32>
    %142 = arith.mulf %141, %140 : vector<1x128xf32>
    %143 = arith.addf %138, %142 : vector<1x128xf32>
    %144 = vector.extract_strided_slice %3 {offsets = [0, 2], sizes = [1, 1], strides = [1, 1]} : vector<1x4xf32> to vector<1x1xf32>
    %145 = vector.extract_strided_slice %131 {offsets = [2, 0], sizes = [1, 128], strides = [1, 1]} : vector<4x128xf32> to vector<1x128xf32>
    %146 = vector.broadcast %144 : vector<1x1xf32> to vector<1x128xf32>
    %147 = arith.mulf %146, %145 : vector<1x128xf32>
    %148 = arith.addf %143, %147 : vector<1x128xf32>
    %149 = vector.extract_strided_slice %3 {offsets = [0, 3], sizes = [1, 1], strides = [1, 1]} : vector<1x4xf32> to vector<1x1xf32>
    %150 = vector.extract_strided_slice %131 {offsets = [3, 0], sizes = [1, 128], strides = [1, 1]} : vector<4x128xf32> to vector<1x128xf32>
    %151 = vector.broadcast %149 : vector<1x1xf32> to vector<1x128xf32>
    %152 = arith.mulf %151, %150 : vector<1x128xf32>
    %153 = arith.addf %148, %152 : vector<1x128xf32>
    %154 = math.absf %153 : vector<1x128xf32>
    %cst_14 = arith.constant 0.000000e+00 : f32
    %155 = vector.broadcast %cst_14 : f32 to vector<1x128xf32>
    %156 = arith.subf %155, %154 : vector<1x128xf32>
    %157 = math.exp %156 : vector<1x128xf32>
    %cst_15 = arith.constant 0.000000e+00 : f32
    %158 = vector.broadcast %cst_15 : f32 to vector<1x128xf32>
    %159 = arith.cmpf oge, %153, %158 : vector<1x128xf32>
    %cst_16 = arith.constant 1.000000e+00 : f32
    %160 = vector.broadcast %cst_16 : f32 to vector<1x128xf32>
    %161 = arith.addf %160, %157 : vector<1x128xf32>
    %cst_17 = arith.constant 1.000000e+00 : f32
    %162 = vector.broadcast %cst_17 : f32 to vector<1x128xf32>
    %163 = arith.divf %162, %161 : vector<1x128xf32>
    %cst_18 = arith.constant 1.000000e+00 : f32
    %164 = vector.broadcast %cst_18 : f32 to vector<1x128xf32>
    %165 = arith.addf %164, %157 : vector<1x128xf32>
    %166 = arith.divf %157, %165 : vector<1x128xf32>
    %167 = arith.select %159, %163, %166 : vector<1x128xi1>, vector<1x128xf32>
    %c0_19 = arith.constant 0 : index
    %c0_20 = arith.constant 0 : index
    %168 = vector.load %arg8[%c0_19, %c0_20] : memref<1x128xf32, #tpu.memory_space<vmem>>, vector<1x128xf32>
    tpu.vector_store %arg8[%c0_19, %c0_20], %167 {strides = array<i32>} : memref<1x128xf32, #tpu.memory_space<vmem>>, vector<1x128xf32>,
    return
  }
  func.func @transform_0(%arg0: i32) -> (i32, i32) {
    %c0_i32 = arith.constant 0 : i32
    %c0_i32_0 = arith.constant 0 : i32
    return %c0_i32, %arg0 : i32, i32
  }
  func.func @transform_1(%arg0: i32) -> (i32, i32) {
    %c0_i32 = arith.constant 0 : i32
    %c0_i32_0 = arith.constant 0 : i32
    %c0_i32_1 = arith.constant 0 : i32
    return %c0_i32, %c0_i32_0 : i32, i32
  }
  func.func @transform_2(%arg0: i32) -> (i32, i32) {
    %c0_i32 = arith.constant 0 : i32
    %c0_i32_0 = arith.constant 0 : i32
    %c0_i32_1 = arith.constant 0 : i32
    return %c0_i32, %c0_i32_0 : i32, i32
  }
  func.func @transform_3(%arg0: i32) -> (i32, i32) {
    %c0_i32 = arith.constant 0 : i32
    %c0_i32_0 = arith.constant 0 : i32
    %c0_i32_1 = arith.constant 0 : i32
    return %c0_i32, %c0_i32_0 : i32, i32
  }
  func.func @transform_4(%arg0: i32) -> (i32, i32) {
    %c0_i32 = arith.constant 0 : i32
    %c0_i32_0 = arith.constant 0 : i32
    %c0_i32_1 = arith.constant 0 : i32
    return %c0_i32, %c0_i32_0 : i32, i32
  }
  func.func @transform_5(%arg0: i32) -> (i32, i32) {
    %c0_i32 = arith.constant 0 : i32
    %c0_i32_0 = arith.constant 0 : i32
    %c0_i32_1 = arith.constant 0 : i32
    return %c0_i32, %c0_i32_0 : i32, i32
  }
  func.func @transform_6(%arg0: i32) -> (i32, i32) {
    %c0_i32 = arith.constant 0 : i32
    %c0_i32_0 = arith.constant 0 : i32
    %c0_i32_1 = arith.constant 0 : i32
    return %c0_i32, %c0_i32_0 : i32, i32
  }
  func.func @transform_7(%arg0: i32) -> (i32, i32) {
    %c0_i32 = arith.constant 0 : i32
    %c0_i32_0 = arith.constant 0 : i32
    return %c0_i32, %arg0 : i32, i32
  }
}

</mosaic_0001>

<llo_original>
// kernel: neural_network_forward.1
$region0: #{neural_network_forward.1}
  #allocation0 [shape = 'u32[]', space=smem, size = 0x4, offset = 0x4, fixed_abs, tag = 'smem constant byte address 0x4 - core index']
  #allocation1 [shape = 'u32[144,128]{1,0:T(1,128)}', space=vmem, size = 0x12000, scoped, tag = 'internal scratch']
  #allocation2 [shape = 'f32[1,1]{1,0:T(1,128)S(1)}', space=vmem, size = 0x200, scoped, tag = 'scoped memory for neural_network_forward.1']
  %s0 = inlined_call_operand.vmem [shape: f32[2,128], index: 0, kind: input, shape index: {}]
  %s1 = inlined_call_operand.vmem [shape: f32[18,2], index: 1, kind: input, shape index: {}]
  %s2 = inlined_call_operand.vmem [shape: f32[18,1], index: 2, kind: input, shape index: {}]
  %s3 = inlined_call_operand.vmem [shape: f32[4,18], index: 3, kind: input, shape index: {}]
  %s4 = inlined_call_operand.vmem [shape: f32[4,1], index: 4, kind: input, shape index: {}]
  %s5 = inlined_call_operand.vmem [shape: f32[1,4], index: 5, kind: input, shape index: {}]
  %s6 = inlined_call_operand.<no memory space> [shape: f32[1,1], index: 6, kind: input, shape index: {}]
  %s7 = inlined_call_operand.vmem [shape: f32[1,128], index: 7, kind: output, shape index: {}]
  %s8 = sld [smem:[#allocation0]]
  $region38: #{neural_network_forward.1} parent=0
    _
  %s10 = ssub.s32 1, %s8
  %s11 = scalar_select 0, %s10, %s8
  %v12 = vstv %s6
  %13 = vst [vmem:[#allocation2] sm:$0x1] %v12
  // Predicated region
  $region2: #{neural_network_forward.1} parent=0 // pred_check
    _
  $region3: #{neural_network_forward.1} parent=0 // pred_check_branch
    %15 = sbr.rel (0) target = $region5
  $region4: #{neural_network_forward.1} parent=0 // pred_region
    _
  $region5: #{neural_network_forward.1} parent=0 // pred_fallthru
    _
  // Predicated region
  $region6: #{neural_network_forward.1} parent=0 // pred_check
    _
  $region7: #{neural_network_forward.1} parent=0 // pred_check_branch
    %17 = sbr.rel (0) target = $region9
  $region8: #{neural_network_forward.1} parent=0 // pred_region
    _
  $region9: #{neural_network_forward.1} parent=0 // pred_fallthru
    _
  // Predicated region
  $region10: #{neural_network_forward.1} parent=0 // pred_check
    _
  $region11: #{neural_network_forward.1} parent=0 // pred_check_branch
    %19 = sbr.rel (0) target = $region13
  $region12: #{neural_network_forward.1} parent=0 // pred_region
    _
  $region13: #{neural_network_forward.1} parent=0 // pred_fallthru
    _
  // Predicated region
  $region14: #{neural_network_forward.1} parent=0 // pred_check
    _
  $region15: #{neural_network_forward.1} parent=0 // pred_check_branch
    %21 = sbr.rel (0) target = $region17
  $region16: #{neural_network_forward.1} parent=0 // pred_region
    _
  $region17: #{neural_network_forward.1} parent=0 // pred_fallthru
    _
  // Predicated region
  $region18: #{neural_network_forward.1} parent=0 // pred_check
    _
  $region19: #{neural_network_forward.1} parent=0 // pred_check_branch
    %23 = sbr.rel (0) target = $region21
  $region20: #{neural_network_forward.1} parent=0 // pred_region
    _
  $region21: #{neural_network_forward.1} parent=0 // pred_fallthru
    _
  // Predicated region
  $region22: #{neural_network_forward.1} parent=0 // pred_check
    _
  $region23: #{neural_network_forward.1} parent=0 // pred_check_branch
    %25 = sbr.rel (0) target = $region25
  $region24: #{neural_network_forward.1} parent=0 // pred_region
    _
  $region25: #{neural_network_forward.1} parent=0 // pred_fallthru
    _
  // Predicated region
  $region26: #{neural_network_forward.1} parent=0 // pred_check
    _
  $region27: #{neural_network_forward.1} parent=0 // pred_check_branch
    %27 = sbr.rel (0) target = $region29
  $region28: #{neural_network_forward.1} parent=0 // pred_region
    _
  $region29: #{neural_network_forward.1} parent=0 // pred_fallthru
    _
  %v28 = vld [vmem:[%s0] sm:$0x3]
  %v29 = vld [vmem:[%s1] sm:$0xff]
  %v30 = vld [vmem:[%s1 + $0x8] sm:$0xff]
  %v31 = vld [vmem:[%s1 + $0x10] sm:$0x3]
  %v32 = vld [vmem:[%s3] sm:$0xf]
  %v33 = vld [vmem:[%s5] sm:$0x1]
  %35 = vset.pattern.permute.xlu0 0
  %36 = vperm.xlu0 %35, %v29
  %v37 = vpop.permute.xlu0 %36
  %40 = vset.pattern.permute.xlu0 0
  %41 = vperm.xlu0 %40, %v30
  %v42 = vpop.permute.xlu0 %41
  %45 = vset.pattern.permute.xlu0 0
  %46 = vperm.xlu0 %45, %v31
  %v47 = vpop.permute.xlu0 %46
  %v49 = vlaneseq
  %v50 = vshrl.u32 %v49, 7
  %v51 = vsub.s32 0, %v50
  %v52 = vrot.slane %v28, %v51
  %v53 = vmul.f32 %v37, %v52
  %v54 = vmul.f32 %v42, %v52
  %v55 = vmul.f32 %v47, %v52
  %56 = vset.pattern.permute.xlu0 1
  %57 = vperm.xlu0 %56, %v29
  %v58 = vpop.permute.xlu0 %57
  %60 = vset.pattern.permute.xlu0 1
  %61 = vperm.xlu0 %60, %v30
  %v62 = vpop.permute.xlu0 %61
  %64 = vset.pattern.permute.xlu0 1
  %65 = vperm.xlu0 %64, %v31
  %v66 = vpop.permute.xlu0 %65
  %v68 = vlaneseq
  %v69 = vshrl.u32 %v68, 7
  %v70 = vsub.s32 1, %v69
  %v71 = vrot.slane %v28, %v70
  %v72 = vmul.f32 %v58, %v71
  %v73 = vmul.f32 %v62, %v71
  %v74 = vmul.f32 %v66, %v71
  %v75 = vadd.f32 %v53, %v72
  %v76 = vadd.f32 %v54, %v73
  %v77 = vadd.f32 %v55, %v74
  %v78 = vld [vmem:[%s2] sm:$0xff]
  %v79 = vld [vmem:[%s2 + $0x8] sm:$0xff]
  %v80 = vld [vmem:[%s2 + $0x10] sm:$0x3]
  %82 = vset.pattern.permute.xlu0 0
  %83 = vperm.xlu0 %82, %v78
  %v84 = vpop.permute.xlu0 %83
  %87 = vset.pattern.permute.xlu0 0
  %88 = vperm.xlu0 %87, %v79
  %v89 = vpop.permute.xlu0 %88
  %92 = vset.pattern.permute.xlu0 0
  %93 = vperm.xlu0 %92, %v80
  %v94 = vpop.permute.xlu0 %93
  %v96 = vadd.f32 %v75, %v84
  %v97 = vadd.f32 %v76, %v89
  %v98 = vadd.f32 %v77, %v94
  %v99 = vmax.f32 %v96, 0.0
  %v100 = vmax.f32 %v97, 0.0
  %v101 = vmax.f32 %v98, 0.0
  %v102 = vld [vmem:[%s4] sm:$0xf]
  %104 = vset.pattern.permute.xlu0 0
  %105 = vperm.xlu0 %104, %v32
  %v106 = vpop.permute.xlu0 %105
  %v108 = vlaneseq
  %v109 = vshrl.u32 %v108, 7
  %v110 = vsub.s32 0, %v109
  %v111 = vrot.slane %v99, %v110
  %v112 = vmul.f32 %v106, %v111
  %114 = vset.pattern.permute.xlu0 0
  %115 = vperm.xlu0 %114, %v102
  %v116 = vpop.permute.xlu0 %115
  %v118 = vadd.f32 %v116, %v112
  %119 = vset.pattern.permute.xlu0 1
  %120 = vperm.xlu0 %119, %v32
  %v121 = vpop.permute.xlu0 %120
  %v123 = vlaneseq
  %v124 = vshrl.u32 %v123, 7
  %v125 = vsub.s32 1, %v124
  %v126 = vrot.slane %v99, %v125
  %v127 = vmul.f32 %v121, %v126
  %v128 = vadd.f32 %v118, %v127
  %129 = vset.pattern.permute.xlu0 2
  %130 = vperm.xlu0 %129, %v32
  %v131 = vpop.permute.xlu0 %130
  %v133 = vlaneseq
  %v134 = vshrl.u32 %v133, 7
  %v135 = vsub.s32 2, %v134
  %v136 = vrot.slane %v99, %v135
  %v137 = vmul.f32 %v131, %v136
  %v138 = vadd.f32 %v128, %v137
  %139 = vset.pattern.permute.xlu0 3
  %140 = vperm.xlu0 %139, %v32
  %v141 = vpop.permute.xlu0 %140
  %v143 = vlaneseq
  %v144 = vshrl.u32 %v143, 7
  %v145 = vsub.s32 3, %v144
  %v146 = vrot.slane %v99, %v145
  %v147 = vmul.f32 %v141, %v146
  %v148 = vadd.f32 %v138, %v147
  %149 = vset.pattern.permute.xlu0 4
  %150 = vperm.xlu0 %149, %v32
  %v151 = vpop.permute.xlu0 %150
  %v153 = vlaneseq
  %v154 = vshrl.u32 %v153, 7
  %v155 = vsub.s32 4, %v154
  %v156 = vrot.slane %v99, %v155
  %v157 = vmul.f32 %v151, %v156
  %v158 = vadd.f32 %v148, %v157
  %159 = vset.pattern.permute.xlu0 5
  %160 = vperm.xlu0 %159, %v32
  %v161 = vpop.permute.xlu0 %160
  %v163 = vlaneseq
  %v164 = vshrl.u32 %v163, 7
  %v165 = vsub.s32 5, %v164
  %v166 = vrot.slane %v99, %v165
  %v167 = vmul.f32 %v161, %v166
  %v168 = vadd.f32 %v158, %v167
  %169 = vset.pattern.permute.xlu0 6
  %170 = vperm.xlu0 %169, %v32
  %v171 = vpop.permute.xlu0 %170
  %v173 = vlaneseq
  %v174 = vshrl.u32 %v173, 7
  %v175 = vsub.s32 6, %v174
  %v176 = vrot.slane %v99, %v175
  %v177 = vmul.f32 %v171, %v176
  %v178 = vadd.f32 %v168, %v177
  %179 = vset.pattern.permute.xlu0 7
  %180 = vperm.xlu0 %179, %v32
  %v181 = vpop.permute.xlu0 %180
  %v183 = vlaneseq
  %v184 = vshrl.u32 %v183, 7
  %v185 = vsub.s32 7, %v184
  %v186 = vrot.slane %v99, %v185
  %v187 = vmul.f32 %v181, %v186
  %v188 = vadd.f32 %v178, %v187
  %189 = vset.pattern.permute.xlu0 8
  %190 = vperm.xlu0 %189, %v32
  %v191 = vpop.permute.xlu0 %190
  %v193 = vlaneseq
  %v194 = vshrl.u32 %v193, 7
  %v195 = vsub.s32 0, %v194
  %v196 = vrot.slane %v100, %v195
  %v197 = vmul.f32 %v191, %v196
  %v198 = vadd.f32 %v188, %v197
  %199 = vset.pattern.permute.xlu0 9
  %200 = vperm.xlu0 %199, %v32
  %v201 = vpop.permute.xlu0 %200
  %v203 = vlaneseq
  %v204 = vshrl.u32 %v203, 7
  %v205 = vsub.s32 1, %v204
  %v206 = vrot.slane %v100, %v205
  %v207 = vmul.f32 %v201, %v206
  %v208 = vadd.f32 %v198, %v207
  %209 = vset.pattern.permute.xlu0 10
  %210 = vperm.xlu0 %209, %v32
  %v211 = vpop.permute.xlu0 %210
  %v213 = vlaneseq
  %v214 = vshrl.u32 %v213, 7
  %v215 = vsub.s32 2, %v214
  %v216 = vrot.slane %v100, %v215
  %v217 = vmul.f32 %v211, %v216
  %v218 = vadd.f32 %v208, %v217
  %219 = vset.pattern.permute.xlu0 11
  %220 = vperm.xlu0 %219, %v32
  %v221 = vpop.permute.xlu0 %220
  %v223 = vlaneseq
  %v224 = vshrl.u32 %v223, 7
  %v225 = vsub.s32 3, %v224
  %v226 = vrot.slane %v100, %v225
  %v227 = vmul.f32 %v221, %v226
  %v228 = vadd.f32 %v218, %v227
  %229 = vset.pattern.permute.xlu0 12
  %230 = vperm.xlu0 %229, %v32
  %v231 = vpop.permute.xlu0 %230
  %v233 = vlaneseq
  %v234 = vshrl.u32 %v233, 7
  %v235 = vsub.s32 4, %v234
  %v236 = vrot.slane %v100, %v235
  %v237 = vmul.f32 %v231, %v236
  %v238 = vadd.f32 %v228, %v237
  %239 = vset.pattern.permute.xlu0 13
  %240 = vperm.xlu0 %239, %v32
  %v241 = vpop.permute.xlu0 %240
  %v243 = vlaneseq
  %v244 = vshrl.u32 %v243, 7
  %v245 = vsub.s32 5, %v244
  %v246 = vrot.slane %v100, %v245
  %v247 = vmul.f32 %v241, %v246
  %v248 = vadd.f32 %v238, %v247
  %249 = vset.pattern.permute.xlu0 14
  %250 = vperm.xlu0 %249, %v32
  %v251 = vpop.permute.xlu0 %250
  %v253 = vlaneseq
  %v254 = vshrl.u32 %v253, 7
  %v255 = vsub.s32 6, %v254
  %v256 = vrot.slane %v100, %v255
  %v257 = vmul.f32 %v251, %v256
  %v258 = vadd.f32 %v248, %v257
  %259 = vset.pattern.permute.xlu0 15
  %260 = vperm.xlu0 %259, %v32
  %v261 = vpop.permute.xlu0 %260
  %v263 = vlaneseq
  %v264 = vshrl.u32 %v263, 7
  %v265 = vsub.s32 7, %v264
  %v266 = vrot.slane %v100, %v265
  %v267 = vmul.f32 %v261, %v266
  %v268 = vadd.f32 %v258, %v267
  %269 = vset.pattern.permute.xlu0 16
  %270 = vperm.xlu0 %269, %v32
  %v271 = vpop.permute.xlu0 %270
  %v273 = vlaneseq
  %v274 = vshrl.u32 %v273, 7
  %v275 = vsub.s32 0, %v274
  %v276 = vrot.slane %v101, %v275
  %v277 = vmul.f32 %v271, %v276
  %v278 = vadd.f32 %v268, %v277
  %279 = vset.pattern.permute.xlu0 17
  %280 = vperm.xlu0 %279, %v32
  %v281 = vpop.permute.xlu0 %280
  %v283 = vlaneseq
  %v284 = vshrl.u32 %v283, 7
  %v285 = vsub.s32 1, %v284
  %v286 = vrot.slane %v101, %v285
  %v287 = vmul.f32 %v281, %v286
  %v288 = vadd.f32 %v278, %v287
  %v289 = vmax.f32 %v288, 0.0
  %v290 = vld [vmem:[#allocation2] sm:$0x1]
  %292 = vset.pattern.permute.xlu0 0
  %293 = vperm.xlu0 %292, %v33
  %v294 = vpop.permute.xlu0 %293
  %v296 = vlaneseq
  %v297 = vshrl.u32 %v296, 7
  %v298 = vsub.s32 0, %v297
  %v299 = vrot.slane %v294, %v298
  %v300 = vmul.f32 %v299, %v289
  %302 = vset.pattern.permute.xlu0 0
  %303 = vperm.xlu0 %302, %v290
  %v304 = vpop.permute.xlu0 %303
  %v306 = vlaneseq
  %v307 = vshrl.u32 %v306, 7
  %v308 = vsub.s32 0, %v307
  %v309 = vrot.slane %v304, %v308
  %v310 = vadd.f32 %v309, %v300
  %311 = vset.pattern.permute.xlu0 1
  %312 = vperm.xlu0 %311, %v33
  %v313 = vpop.permute.xlu0 %312
  %v315 = vlaneseq
  %v316 = vshrl.u32 %v315, 7
  %v317 = vsub.s32 0, %v316
  %v318 = vrot.slane %v313, %v317
  %v319 = vmul.f32 %v318, %v289
  %v321 = vrot.slane %v319, 1
  %v323 = vadd.f32 %v310, %v321
  %324 = vset.pattern.permute.xlu0 2
  %325 = vperm.xlu0 %324, %v33
  %v326 = vpop.permute.xlu0 %325
  %v328 = vlaneseq
  %v329 = vshrl.u32 %v328, 7
  %v330 = vsub.s32 0, %v329
  %v331 = vrot.slane %v326, %v330
  %v332 = vmul.f32 %v331, %v289
  %v334 = vrot.slane %v332, 2
  %v336 = vadd.f32 %v323, %v334
  %337 = vset.pattern.permute.xlu0 3
  %338 = vperm.xlu0 %337, %v33
  %v339 = vpop.permute.xlu0 %338
  %v341 = vlaneseq
  %v342 = vshrl.u32 %v341, 7
  %v343 = vsub.s32 0, %v342
  %v344 = vrot.slane %v339, %v343
  %v345 = vmul.f32 %v344, %v289
  %v347 = vrot.slane %v345, 3
  %v349 = vadd.f32 %v336, %v347
  %v350 = vand.u32 2147483647, %v349
  %v351 = vsub.f32 0.0, %v350
  %v352 = vmul.f32 %v351, 1.442695
  %v353 = vpow.pop %v352
  %vm354 = vcmp.ge.f32.partialorder %v349, 0.0
  %v355 = vadd.f32 %v353, 1.0
  %v356 = vrcp.pop %v355
  %v357 = vmul.f32 1.0, %v356
  %v358 = vmul.f32 %v353, %v356
  %v359 = vsel %vm354, %v357, %v358
  %360 = vst [vmem:[%s7] sm:$0x1] %v359
  // Predicated region
  $region30: #{neural_network_forward.1} parent=0 // pred_check
    _
  $region31: #{neural_network_forward.1} parent=0 // pred_check_branch
    %362 = sbr.rel (0) target = $region33
  $region32: #{neural_network_forward.1} parent=0 // pred_region
    _
  $region33: #{neural_network_forward.1} parent=0 // pred_fallthru
    _
  // Predicated region
  $region34: #{neural_network_forward.1} parent=0 // pred_check
    _
  $region35: #{neural_network_forward.1} parent=0 // pred_check_branch
    %364 = sbr.rel (0) target = $region37
  $region36: #{neural_network_forward.1} parent=0 // pred_region
    _
  $region37: #{neural_network_forward.1} parent=0 // pred_fallthru
    _

</llo_original>
